<compile_context>
chip_gen: v6e
topology: v6e:2x2x1
jax: 0.10.0
libtpu: 0.0.40
codegen_flags: <defaults>
</compile_context>

<pallas_src>
import functools

import jax
import jax.numpy as jnp
from jax.experimental import pallas as pl
from jax.experimental.pallas import tpu as pltpu

LAYER_NORM_EPS = 1e-06


def _round_up(x, m):
    return ((x + m - 1) // m) * m


def _layer_norm_masked(y, gamma, beta, eps, d_true, d_pad):
    """LayerNorm over the last dim where only the first d_true lanes are real."""
    if d_true == d_pad:
        y_valid = y
        mask = None
    else:
        lane = jax.lax.broadcasted_iota(jnp.int32, y.shape, dimension=y.ndim - 1)
        mask = lane < d_true
        y_valid = jnp.where(mask, y, 0.0)
    mean = jnp.sum(y_valid, axis=-1, keepdims=True) / d_true
    diff = y - mean
    if mask is not None:
        diff = jnp.where(mask, diff, 0.0)
    var = jnp.sum(diff * diff, axis=-1, keepdims=True) / d_true  # biased, like torch
    return gamma * (y - mean) * jax.lax.rsqrt(var + eps) + beta


def _ff_kernel(x_ref, w1_ref, b1_ref, w2_ref, b2_ref, g_ref, bt_ref,
               o_ref, acc_ref, *, pre_norm: bool, d_true: int, d_pad: int):
    k = pl.program_id(1)
    nk = pl.num_programs(1)

    x = x_ref[...].astype(jnp.float32)
    gamma = g_ref[...].astype(jnp.float32)   # (1, d_pad)
    beta = bt_ref[...].astype(jnp.float32)   # (1, d_pad)

    if pre_norm:
        core_in = _layer_norm_masked(x, gamma, beta, LAYER_NORM_EPS, d_true, d_pad)
    else:
        core_in = x

    @pl.when(k == 0)
    def _():
        acc_ref[...] = jnp.zeros_like(acc_ref)

    # Linear1 (hidden slice k) + ReLU; operands stay in the weight dtype
    # (bf16 weights -> native bf16 MXU), accumulation in f32.
    h = jnp.dot(core_in.astype(w1_ref.dtype), w1_ref[...],
                preferred_element_type=jnp.float32)
    h = jnp.maximum(h + b1_ref[...].astype(jnp.float32), 0.0)
    # Linear2 partial product for this hidden slice, accumulated in VMEM.
    acc_ref[...] += jnp.dot(h.astype(w2_ref.dtype), w2_ref[...],
                            preferred_element_type=jnp.float32)

    @pl.when(k == nk - 1)
    def _():
        y = x + acc_ref[...] + b2_ref[...].astype(jnp.float32)
        if pre_norm:
            out = y
        else:
            out = _layer_norm_masked(y, gamma, beta, LAYER_NORM_EPS, d_true, d_pad)
        o_ref[...] = out.astype(o_ref.dtype)


def positionwise_ff(x, w1, b1, w2, b2, gamma, beta, *, pre_norm=False,
                    tm=256, tk=512):
    """x: (batch, seq, d_model). Weights stored as (in, out). Returns same shape/dtype.

    Pass bf16 w1/w2 on v6e/v7x to use the native-bf16 MXU (f32 accumulate).
    """
    B, S, D = x.shape
    D_w, Din = w1.shape
    assert D_w == D and w2.shape == (Din, D)
    M = B * S

    # Pad feature dims to lane multiples of 128 (lane-dense stores, full vregs).
    Dp = _round_up(D, 128)
    Dinp = _round_up(Din, 128)

    # Row tile: multiple of 8 sublanes, no assert on divisibility -> pad rows.
    tm = max(8, min(tm, _round_up(M, 8)))
    tm = _round_up(tm, 8)
    Mp = _round_up(M, tm)
    grid_m = pl.cdiv(Mp, tm)

    # Hidden tile: multiple of 128 that divides padded Din.
    tk = min(max(tk, 128), Dinp)
    tk = (tk // 128) * 128
    while Dinp % tk:
        tk -= 128
    grid_k = Dinp // tk

    x2 = jnp.pad(x.reshape(M, D), ((0, Mp - M), (0, Dp - D)))
    w1p = jnp.pad(w1, ((0, Dp - D), (0, Dinp - Din)))
    b1p = jnp.pad(b1, ((0, Dinp - Din),)).reshape(1, Dinp)
    w2p = jnp.pad(w2, ((0, Dinp - Din), (0, Dp - D)))
    b2p = jnp.pad(b2, ((0, Dp - D),)).reshape(1, Dp)
    gp = jnp.pad(gamma, ((0, Dp - D),)).reshape(1, Dp)
    btp = jnp.pad(beta, ((0, Dp - D),)).reshape(1, Dp)

    # Explicit scoped-VMEM budget from the tile footprint (double-buffered
    # pipelined blocks + f32 accumulator), with headroom.
    wb = w1p.dtype.itemsize
    est = 2 * (tm * Dp * 4)            # x tile
    est += 2 * (tm * Dp * x.dtype.itemsize)  # out tile
    est += 2 * (Dp * tk * wb)          # W1 tile
    est += 2 * (tk * Dp * wb)          # W2 tile
    est += 2 * (tk + 3 * Dp) * 4       # b1 / b2 / gamma / beta
    est += tm * Dp * 4                 # accumulator scratch
    vmem_limit = min(max(int(est * 1.5) + (4 << 20), 32 << 20), 128 << 20)

    kernel = functools.partial(_ff_kernel, pre_norm=pre_norm,
                               d_true=D, d_pad=Dp)

    out2 = pl.pallas_call(
        kernel,
        out_shape=jax.ShapeDtypeStruct((Mp, Dp), x.dtype),
        grid_spec=pltpu.PrefetchScalarGridSpec(
            num_scalar_prefetch=0,
            grid=(grid_m, grid_k),
            in_specs=[
                pl.BlockSpec((tm, Dp), lambda i, k: (i, 0)),    # x row tile
                pl.BlockSpec((Dp, tk), lambda i, k: (0, k)),    # W1 hidden slice
                pl.BlockSpec((1, tk), lambda i, k: (0, k)),     # b1 hidden slice
                pl.BlockSpec((tk, Dp), lambda i, k: (k, 0)),    # W2 hidden slice
                pl.BlockSpec((1, Dp), lambda i, k: (0, 0)),     # b2
                pl.BlockSpec((1, Dp), lambda i, k: (0, 0)),     # gamma
                pl.BlockSpec((1, Dp), lambda i, k: (0, 0)),     # beta
            ],
            out_specs=pl.BlockSpec((tm, Dp), lambda i, k: (i, 0)),
            scratch_shapes=[pltpu.VMEM((tm, Dp), jnp.float32)],
        ),
        compiler_params=pltpu.CompilerParams(
            dimension_semantics=("parallel", "arbitrary"),
            vmem_limit_bytes=vmem_limit),
    )(x2, w1p, b1p, w2p, b2p, gp, btp)

    return out2[:M, :D].reshape(B, S, D)


def positionwise_ff_ref(x, w1, b1, w2, b2, gamma, beta, *, pre_norm=False):
    """Pure-JAX reference mirroring the PyTorch forward (eval mode)."""
    def core(z):
        h = jnp.maximum(z @ w1 + b1, 0.0)
        return h @ w2 + b2

    def ln(y):
        mean = jnp.mean(y, axis=-1, keepdims=True)
        var = jnp.mean((y - mean) ** 2, axis=-1, keepdims=True)
        return gamma * (y - mean) / jnp.sqrt(var + LAYER_NORM_EPS) + beta

    if pre_norm:
        return x + core(ln(x))
    return ln(x + core(x))


if __name__ == "__main__":
    # Small shapes: batch=2, seq=8, d_model=32, d_inner=64
    B, S, D, Din = 2, 8, 32, 64
    key = jax.random.PRNGKey(0)
    kx, kw1, kb1, kw2, kb2 = jax.random.split(key, 5)

    x = jax.random.normal(kx, (B, S, D), dtype=jnp.float32)
    # Linear params stored as (in, out) (transposed vs torch.nn.Linear.weight).
    w1 = jax.random.normal(kw1, (D, Din), dtype=jnp.float32) * 0.05
    b1 = jax.random.normal(kb1, (Din,), dtype=jnp.float32) * 0.05
    w2 = jax.random.normal(kw2, (Din, D), dtype=jnp.float32) * 0.05
    b2 = jax.random.normal(kb2, (D,), dtype=jnp.float32) * 0.05
    # nn.LayerNorm defaults: weight=1, bias=0.
    gamma = jnp.ones((D,), dtype=jnp.float32)
    beta = jnp.zeros((D,), dtype=jnp.float32)

    ok = True
    for pre_norm in (False, True):
        out = positionwise_ff(x, w1, b1, w2, b2, gamma, beta, pre_norm=pre_norm)
        out = jax.block_until_ready(out)
        ref = positionwise_ff_ref(x, w1, b1, w2, b2, gamma, beta,
                                  pre_norm=pre_norm)
        if not jnp.allclose(out, ref, atol=1e-5, rtol=1e-5):
            ok = False
            print(f"MISMATCH pre_norm={pre_norm}: "
                  f"max err {float(jnp.max(jnp.abs(out - ref)))}")

    if ok:
        print("KERNEL_OK")
</pallas_src>

<mosaic_0001>
module attributes {stable_mosaic.version = 11 : i64} {
  func.func @_ff_kernel(%arg0: i32, %arg1: i32, %arg2: memref<16x128xf32, #tpu.memory_space<vmem>>, %arg3: memref<128x128xf32, #tpu.memory_space<vmem>>, %arg4: memref<1x128xf32, #tpu.memory_space<vmem>>, %arg5: memref<128x128xf32, #tpu.memory_space<vmem>>, %arg6: memref<1x128xf32, #tpu.memory_space<vmem>>, %arg7: memref<1x128xf32, #tpu.memory_space<vmem>>, %arg8: memref<1x128xf32, #tpu.memory_space<vmem>>, %arg9: memref<16x128xf32, #tpu.memory_space<vmem>>, %arg10: memref<16x128xf32, #tpu.memory_space<vmem>>) attributes {dimension_semantics = [#tpu.dimension_semantics<parallel>, #tpu.dimension_semantics<arbitrary>], iteration_bounds = array<i64: 1, 1>, scalar_prefetch = 0 : i64, scratch_operands = 1 : i64, tpu.core_type = #tpu.core_type<tc>, window_params = [{transform_indices = @transform_0, window_bounds = array<i64: 16, 128>}, {transform_indices = @transform_1, window_bounds = array<i64: 128, 128>}, {transform_indices = @transform_2, window_bounds = array<i64: 1, 128>}, {transform_indices = @transform_3, window_bounds = array<i64: 128, 128>}, {pipeline_mode = #tpu.pipeline_mode<synchronous>, transform_indices = @transform_4, window_bounds = array<i64: 1, 128>}, {pipeline_mode = #tpu.pipeline_mode<synchronous>, transform_indices = @transform_5, window_bounds = array<i64: 1, 128>}, {pipeline_mode = #tpu.pipeline_mode<synchronous>, transform_indices = @transform_6, window_bounds = array<i64: 1, 128>}, {transform_indices = @transform_7, window_bounds = array<i64: 16, 128>}]} {
    %c0 = arith.constant 0 : index
    %c0_0 = arith.constant 0 : index
    %0 = vector.load %arg2[%c0, %c0_0] : memref<16x128xf32, #tpu.memory_space<vmem>>, vector<16x128xf32>
    %c0_1 = arith.constant 0 : index
    %c0_2 = arith.constant 0 : index
    %1 = vector.load %arg7[%c0_1, %c0_2] : memref<1x128xf32, #tpu.memory_space<vmem>>, vector<1x128xf32>
    %c0_3 = arith.constant 0 : index
    %c0_4 = arith.constant 0 : index
    %2 = vector.load %arg8[%c0_3, %c0_4] : memref<1x128xf32, #tpu.memory_space<vmem>>, vector<1x128xf32>
    %c0_i32 = arith.constant 0 : i32
    %3 = arith.cmpi eq, %arg1, %c0_i32 : i32
    %4 = arith.extui %3 : i1 to i32
    %c0_i32_5 = arith.constant 0 : i32
    %5 = arith.cmpi ne, %4, %c0_i32_5 : i32
    scf.if %5 {
      %cst_20 = arith.constant 0.000000e+00 : f32
      %21 = vector.broadcast %cst_20 : f32 to vector<16x128xf32>
      %c0_21 = arith.constant 0 : index
      %c0_22 = arith.constant 0 : index
      %22 = vector.load %arg10[%c0_21, %c0_22] : memref<16x128xf32, #tpu.memory_space<vmem>>, vector<16x128xf32>
      tpu.vector_store %arg10[%c0_21, %c0_22], %21 {strides = array<i32>} : memref<16x128xf32, #tpu.memory_space<vmem>>, vector<16x128xf32>,
    } else {
    }
    %c0_6 = arith.constant 0 : index
    %c0_7 = arith.constant 0 : index
    %6 = vector.load %arg3[%c0_6, %c0_7] : memref<128x128xf32, #tpu.memory_space<vmem>>, vector<128x128xf32>
    %cst = arith.constant dense<0.000000e+00> : vector<16x128xf32>
    %7 = tpu.matmul %0, %6, %cst {dimension_numbers = #tpu.dot_dimension_numbers<[1], [0], [0], [1], [0, 0, 1, 1], [], []>} : vector<16x128xf32>, vector<128x128xf32>, vector<16x128xf32> -> vector<16x128xf32>
    %c0_8 = arith.constant 0 : index
    %c0_9 = arith.constant 0 : index
    %8 = vector.load %arg4[%c0_8, %c0_9] : memref<1x128xf32, #tpu.memory_space<vmem>>, vector<1x128xf32>
    %9 = vector.broadcast %8 : vector<1x128xf32> to vector<16x128xf32>
    %10 = arith.addf %7, %9 : vector<16x128xf32>
    %cst_10 = arith.constant 0.000000e+00 : f32
    %11 = vector.broadcast %cst_10 : f32 to vector<16x128xf32>
    %12 = arith.maximumf %10, %11 : vector<16x128xf32>
    %c0_11 = arith.constant 0 : index
    %c0_12 = arith.constant 0 : index
    %13 = vector.load %arg10[%c0_11, %c0_12] : memref<16x128xf32, #tpu.memory_space<vmem>>, vector<16x128xf32>
    %c0_13 = arith.constant 0 : index
    %c0_14 = arith.constant 0 : index
    %14 = vector.load %arg5[%c0_13, %c0_14] : memref<128x128xf32, #tpu.memory_space<vmem>>, vector<128x128xf32>
    %cst_15 = arith.constant dense<0.000000e+00> : vector<16x128xf32>
    %15 = tpu.matmul %12, %14, %cst_15 {dimension_numbers = #tpu.dot_dimension_numbers<[1], [0], [0], [1], [0, 0, 1, 1], [], []>} : vector<16x128xf32>, vector<128x128xf32>, vector<16x128xf32> -> vector<16x128xf32>
    %16 = arith.addf %13, %15 : vector<16x128xf32>
    %c0_16 = arith.constant 0 : index
    %c0_17 = arith.constant 0 : index
    %17 = vector.load %arg10[%c0_16, %c0_17] : memref<16x128xf32, #tpu.memory_space<vmem>>, vector<16x128xf32>
    tpu.vector_store %arg10[%c0_16, %c0_17], %16 {strides = array<i32>} : memref<16x128xf32, #tpu.memory_space<vmem>>, vector<16x128xf32>,
    %c0_i32_18 = arith.constant 0 : i32
    %18 = arith.cmpi eq, %arg1, %c0_i32_18 : i32
    %19 = arith.extui %18 : i1 to i32
    %c0_i32_19 = arith.constant 0 : i32
    %20 = arith.cmpi ne, %19, %c0_i32_19 : i32
    scf.if %20 {
      %c0_20 = arith.constant 0 : index
      %c0_21 = arith.constant 0 : index
      %21 = vector.load %arg10[%c0_20, %c0_21] : memref<16x128xf32, #tpu.memory_space<vmem>>, vector<16x128xf32>
      %22 = arith.addf %0, %21 : vector<16x128xf32>
      %c0_22 = arith.constant 0 : index
      %c0_23 = arith.constant 0 : index
      %23 = vector.load %arg6[%c0_22, %c0_23] : memref<1x128xf32, #tpu.memory_space<vmem>>, vector<1x128xf32>
      %24 = vector.broadcast %23 : vector<1x128xf32> to vector<16x128xf32>
      %25 = arith.addf %22, %24 : vector<16x128xf32>
      %26 = tpu.iota {dimensions = array<i32: 1>} : vector<16x128xi32>
      %c32_i32 = arith.constant 32 : i32
      %27 = vector.broadcast %c32_i32 : i32 to vector<16x128xi32>
      %28 = arith.cmpi slt, %26, %27 : vector<16x128xi32>
      %cst_24 = arith.constant 0.000000e+00 : f32
      %29 = vector.broadcast %cst_24 : f32 to vector<16x128xf32>
      %30 = arith.select %28, %25, %29 : vector<16x128xi1>, vector<16x128xf32>
      %cst_25 = arith.constant dense<0.000000e+00> : vector<16xf32>
      %31 = vector.multi_reduction <add>, %30, %cst_25 [1] : vector<16x128xf32> to vector<16xf32>
      %32 = vector.shape_cast %31 : vector<16xf32> to vector<16x1xf32>
      %cst_26 = arith.constant 3.200000e+01 : f32
      %33 = vector.broadcast %cst_26 : f32 to vector<16x1xf32>
      %34 = arith.divf %32, %33 : vector<16x1xf32>
      %35 = vector.broadcast %34 : vector<16x1xf32> to vector<16x128xf32>
      %36 = arith.subf %25, %35 : vector<16x128xf32>
      %cst_27 = arith.constant 0.000000e+00 : f32
      %37 = vector.broadcast %cst_27 : f32 to vector<16x128xf32>
      %38 = arith.select %28, %36, %37 : vector<16x128xi1>, vector<16x128xf32>
      %39 = arith.mulf %38, %38 : vector<16x128xf32>
      %cst_28 = arith.constant dense<0.000000e+00> : vector<16xf32>
      %40 = vector.multi_reduction <add>, %39, %cst_28 [1] : vector<16x128xf32> to vector<16xf32>
      %41 = vector.shape_cast %40 : vector<16xf32> to vector<16x1xf32>
      %cst_29 = arith.constant 3.200000e+01 : f32
      %42 = vector.broadcast %cst_29 : f32 to vector<16x1xf32>
      %43 = arith.divf %41, %42 : vector<16x1xf32>
      %44 = vector.broadcast %34 : vector<16x1xf32> to vector<16x128xf32>
      %45 = arith.subf %25, %44 : vector<16x128xf32>
      %46 = vector.broadcast %1 : vector<1x128xf32> to vector<16x128xf32>
      %47 = arith.mulf %46, %45 : vector<16x128xf32>
      %cst_30 = arith.constant 9.99999997E-7 : f32
      %48 = vector.broadcast %cst_30 : f32 to vector<16x1xf32>
      %49 = arith.addf %43, %48 : vector<16x1xf32>
      %50 = math.rsqrt %49 : vector<16x1xf32>
      %51 = vector.broadcast %50 : vector<16x1xf32> to vector<16x128xf32>
      %52 = arith.mulf %47, %51 : vector<16x128xf32>
      %53 = vector.broadcast %2 : vector<1x128xf32> to vector<16x128xf32>
      %54 = arith.addf %52, %53 : vector<16x128xf32>
      %c0_31 = arith.constant 0 : index
      %c0_32 = arith.constant 0 : index
      %55 = vector.load %arg9[%c0_31, %c0_32] : memref<16x128xf32, #tpu.memory_space<vmem>>, vector<16x128xf32>
      tpu.vector_store %arg9[%c0_31, %c0_32], %54 {strides = array<i32>} : memref<16x128xf32, #tpu.memory_space<vmem>>, vector<16x128xf32>,
    } else {
    }
    return
  }
  func.func @transform_0(%arg0: i32, %arg1: i32) -> (i32, i32) {
    %c0_i32 = arith.constant 0 : i32
    %c0_i32_0 = arith.constant 0 : i32
    return %arg0, %c0_i32 : i32, i32
  }
  func.func @transform_1(%arg0: i32, %arg1: i32) -> (i32, i32) {
    %c0_i32 = arith.constant 0 : i32
    %c0_i32_0 = arith.constant 0 : i32
    return %c0_i32, %arg1 : i32, i32
  }
  func.func @transform_2(%arg0: i32, %arg1: i32) -> (i32, i32) {
    %c0_i32 = arith.constant 0 : i32
    %c0_i32_0 = arith.constant 0 : i32
    return %c0_i32, %arg1 : i32, i32
  }
  func.func @transform_3(%arg0: i32, %arg1: i32) -> (i32, i32) {
    %c0_i32 = arith.constant 0 : i32
    %c0_i32_0 = arith.constant 0 : i32
    return %arg1, %c0_i32 : i32, i32
  }
  func.func @transform_4(%arg0: i32, %arg1: i32) -> (i32, i32) {
    %c0_i32 = arith.constant 0 : i32
    %c0_i32_0 = arith.constant 0 : i32
    %c0_i32_1 = arith.constant 0 : i32
    return %c0_i32, %c0_i32_0 : i32, i32
  }
  func.func @transform_5(%arg0: i32, %arg1: i32) -> (i32, i32) {
    %c0_i32 = arith.constant 0 : i32
    %c0_i32_0 = arith.constant 0 : i32
    %c0_i32_1 = arith.constant 0 : i32
    return %c0_i32, %c0_i32_0 : i32, i32
  }
  func.func @transform_6(%arg0: i32, %arg1: i32) -> (i32, i32) {
    %c0_i32 = arith.constant 0 : i32
    %c0_i32_0 = arith.constant 0 : i32
    %c0_i32_1 = arith.constant 0 : i32
    return %c0_i32, %c0_i32_0 : i32, i32
  }
  func.func @transform_7(%arg0: i32, %arg1: i32) -> (i32, i32) {
    %c0_i32 = arith.constant 0 : i32
    %c0_i32_0 = arith.constant 0 : i32
    return %arg0, %c0_i32 : i32, i32
  }
}

</mosaic_0001>

<llo_original>
// kernel: tpu_custom_call.1
$region0: #{tpu_custom_call.1}
  #allocation0 [shape = 'u32[]', space=smem, size = 0x4, offset = 0x4, fixed_abs, tag = 'smem constant byte address 0x4 - core index']
  #allocation1 [shape = 'u32[144,128]{1,0:T(1,128)}', space=vmem, size = 0x12000, scoped, tag = 'internal scratch']
  #allocation2 [shape = 'f32[16,128]{1,0:T(8,128)}', space=vmem, size = 0x2000, scoped, tag = 'scratch operand']
  %s0 = inlined_call_operand.hbm [shape: f32[16,128], index: 0, kind: input, shape index: {}]
  %s1 = inlined_call_operand.hbm [shape: f32[128,128], index: 1, kind: input, shape index: {}]
  %s2 = inlined_call_operand.vmem [shape: f32[1,128], index: 2, kind: input, shape index: {}]
  %s3 = inlined_call_operand.hbm [shape: f32[128,128], index: 3, kind: input, shape index: {}]
  %s4 = inlined_call_operand.vmem [shape: f32[1,128], index: 4, kind: input, shape index: {}]
  %s5 = inlined_call_operand.vmem [shape: f32[1,128], index: 5, kind: input, shape index: {}]
  %s6 = inlined_call_operand.vmem [shape: f32[1,128], index: 6, kind: input, shape index: {}]
  %s7 = inlined_call_operand.hbm [shape: f32[16,128], index: 7, kind: output, shape index: {}]
  %s8 = sld [smem:[#allocation0]]
  $region58: #{tpu_custom_call.1} parent=0
    _
  %s10 = ssub.s32 1, %s8
  %s11 = scalar_select 0, %s10, %s8
  $region1: #{tpu_custom_call.1} parent=0
    #allocation3 [shape = 'u8[8192]{0}', space=vmem, size = 0x2000, scoped, tag = 'input window, operand 0, single buffered']
    #allocation4 [shape = 's32[1]{0}', space=sflag, size = 0x4, scoped, tag = 'scoped memory for tpu_custom_call.1']
    #allocation5 [shape = 's32[1]{0}', space=sflag, size = 0x4, scoped, tag = 'scoped memory for tpu_custom_call.1']
    #allocation6 [shape = 'u8[65536]{0}', space=vmem, size = 0x10000, scoped, tag = 'input window, operand 1, single buffered']
    #allocation7 [shape = 's32[1]{0}', space=sflag, size = 0x4, scoped, tag = 'scoped memory for tpu_custom_call.1']
    #allocation8 [shape = 'u8[65536]{0}', space=vmem, size = 0x10000, scoped, tag = 'input window, operand 3, single buffered']
    #allocation9 [shape = 'u8[8192]{0}', space=vmem, size = 0x2000, scoped, tag = 'output window, operand 0, single buffered']
    %12 = vsyncpa [#allocation4], 0
    %13 = vsyncpa [#allocation7], 0
    %14 = vsyncpa [#allocation5], 0
    // Predicated region
    $region2: #{tpu_custom_call.1} parent=1 // pred_check
      _
    $region3: #{tpu_custom_call.1} parent=1 // pred_check_branch
      %16 = sbr.rel (0) target = $region5
    $region4: #{tpu_custom_call.1} parent=1 // pred_region
      %s18 = ssub.s32 256, 256
      %19 = vsyncadd [#allocation4], %s18
      %s20 = sshll.u32 [#allocation3], 4
      %s21 = int_to_ptr.vmem [resolvable:$true] %s20
      %26 = dma.hbm_to_vmem [thread:$0]  %s0, 256, %s21, [#allocation4], 128, 128, 8
    $region5: #{tpu_custom_call.1} parent=1 // pred_fallthru
      _
    // Predicated region
    $region6: #{tpu_custom_call.1} parent=1 // pred_check
      _
    $region7: #{tpu_custom_call.1} parent=1 // pred_check_branch
      %28 = sbr.rel (0) target = $region9
    $region8: #{tpu_custom_call.1} parent=1 // pred_region
      %s30 = ssub.s32 2048, 2048
      %31 = vsyncadd [#allocation7], %s30
      %s32 = sshll.u32 [#allocation6], 4
      %s33 = int_to_ptr.vmem [resolvable:$true] %s32
      %38 = dma.hbm_to_vmem [thread:$0]  %s1, 2048, %s33, [#allocation7], 128, 128, 8
    $region9: #{tpu_custom_call.1} parent=1 // pred_fallthru
      _
    // Predicated region
    $region10: #{tpu_custom_call.1} parent=1 // pred_check
      _
    $region11: #{tpu_custom_call.1} parent=1 // pred_check_branch
      %40 = sbr.rel (0) target = $region13
    $region12: #{tpu_custom_call.1} parent=1 // pred_region
      _
    $region13: #{tpu_custom_call.1} parent=1 // pred_fallthru
      _
    // Predicated region
    $region14: #{tpu_custom_call.1} parent=1 // pred_check
      _
    $region15: #{tpu_custom_call.1} parent=1 // pred_check_branch
      %42 = sbr.rel (0) target = $region17
    $region16: #{tpu_custom_call.1} parent=1 // pred_region
      %s44 = ssub.s32 2048, 2048
      %45 = vsyncadd [#allocation7], %s44
      %s46 = sshll.u32 [#allocation8], 4
      %s47 = int_to_ptr.vmem [resolvable:$true] %s46
      %52 = dma.hbm_to_vmem [thread:$0]  %s3, 2048, %s47, [#allocation7], 128, 128, 8
    $region17: #{tpu_custom_call.1} parent=1 // pred_fallthru
      _
    // Predicated region
    $region18: #{tpu_custom_call.1} parent=1 // pred_check
      _
    $region19: #{tpu_custom_call.1} parent=1 // pred_check_branch
      %54 = sbr.rel (0) target = $region21
    $region20: #{tpu_custom_call.1} parent=1 // pred_region
      _
    $region21: #{tpu_custom_call.1} parent=1 // pred_fallthru
      _
    // Predicated region
    $region22: #{tpu_custom_call.1} parent=1 // pred_check
      _
    $region23: #{tpu_custom_call.1} parent=1 // pred_check_branch
      %56 = sbr.rel (0) target = $region25
    $region24: #{tpu_custom_call.1} parent=1 // pred_region
      _
    $region25: #{tpu_custom_call.1} parent=1 // pred_fallthru
      _
    // Predicated region
    $region26: #{tpu_custom_call.1} parent=1 // pred_check
      _
    $region27: #{tpu_custom_call.1} parent=1 // pred_check_branch
      %58 = sbr.rel (0) target = $region29
    $region28: #{tpu_custom_call.1} parent=1 // pred_region
      _
    $region29: #{tpu_custom_call.1} parent=1 // pred_fallthru
      _
    // Predicated region
    $region30: #{tpu_custom_call.1} parent=1 // pred_check
      _
    $region31: #{tpu_custom_call.1} parent=1 // pred_check_branch
      %60 = sbr.rel (0) target = $region33
    $region32: #{tpu_custom_call.1} parent=1 // pred_region
      %61 = dma.done [#allocation4], 256
    $region33: #{tpu_custom_call.1} parent=1 // pred_fallthru
      _
    // Predicated region
    $region34: #{tpu_custom_call.1} parent=1 // pred_check
      _
    $region35: #{tpu_custom_call.1} parent=1 // pred_check_branch
      %63 = sbr.rel (0) target = $region37
    $region36: #{tpu_custom_call.1} parent=1 // pred_region
      %64 = dma.done [#allocation7], 2048
    $region37: #{tpu_custom_call.1} parent=1 // pred_fallthru
      _
    // Predicated region
    $region38: #{tpu_custom_call.1} parent=1 // pred_check
      _
    $region39: #{tpu_custom_call.1} parent=1 // pred_check_branch
      %66 = sbr.rel (0) target = $region41
    $region40: #{tpu_custom_call.1} parent=1 // pred_region
      %67 = dma.done [#allocation7], 2048
    $region41: #{tpu_custom_call.1} parent=1 // pred_fallthru
      _
    %v68 = vld [vmem:[#allocation3] sm:$0xff]
    %v69 = vld [vmem:[#allocation3 + $0x8] sm:$0xff]
    %v70 = vld [vmem:[%s5] sm:$0x1]
    %v71 = vld [vmem:[%s6] sm:$0x1]
    %p72 = scmp.eq.s32.totalorder 0, 0
    // Predicated region
    $region42: #{tpu_custom_call.1} parent=1 // pred_check
      %p73 = pneg %p72
    $region43: #{tpu_custom_call.1} parent=1 // pred_check_branch
      %75 = sbr.rel (%p73) target = $region45
    $region44: #{tpu_custom_call.1} parent=1 // pred_region
      %76 = vst [vmem:[#allocation2] sm:$0xff] 0.0
      %77 = vst [vmem:[#allocation2 + $0x8] sm:$0xff] 0.0
    $region45: #{tpu_custom_call.1} parent=1 // pred_fallthru
      _
    %v78 = vld [vmem:[#allocation6] sm:$0xff]
    %v79 = vld [vmem:[#allocation6 + $0x8] sm:$0xff]
    %v80 = vld [vmem:[#allocation6 + $0x10] sm:$0xff]
    %v81 = vld [vmem:[#allocation6 + $0x18] sm:$0xff]
    %v82 = vld [vmem:[#allocation6 + $0x20] sm:$0xff]
    %v83 = vld [vmem:[#allocation6 + $0x28] sm:$0xff]
    %v84 = vld [vmem:[#allocation6 + $0x30] sm:$0xff]
    %v85 = vld [vmem:[#allocation6 + $0x38] sm:$0xff]
    %v86 = vld [vmem:[#allocation6 + $0x40] sm:$0xff]
    %v87 = vld [vmem:[#allocation6 + $0x48] sm:$0xff]
    %v88 = vld [vmem:[#allocation6 + $0x50] sm:$0xff]
    %v89 = vld [vmem:[#allocation6 + $0x58] sm:$0xff]
    %v90 = vld [vmem:[#allocation6 + $0x60] sm:$0xff]
    %v91 = vld [vmem:[#allocation6 + $0x68] sm:$0xff]
    %v92 = vld [vmem:[#allocation6 + $0x70] sm:$0xff]
    %v93 = vld [vmem:[#allocation6 + $0x78] sm:$0xff]
    %v94 = vld [vmem:[%s2] sm:$0x1]
    %v96 = vlaneseq
    %v97 = vshrl.u32 %v96, 7
    %v98 = vsub.s32 0, %v97
    %v99 = vrot.slane %v94, %v98
    %101 = vmatprep.subr.mxu0 0.0
    %102 = vmatpush1.msra.mxu0 %v93
    %103 = vmatprep.subr.mxu0 0.0
    %104 = vmatpush1.msra.mxu0 %v92
    %105 = vmatprep.subr.mxu0 0.0
    %106 = vmatpush1.msra.mxu0 %v91
    %107 = vmatprep.subr.mxu0 0.0
    %108 = vmatpush1.msra.mxu0 %v90
    %109 = vmatprep.subr.mxu0 0.0
    %110 = vmatpush1.msra.mxu0 %v89
    %111 = vmatprep.subr.mxu0 0.0
    %112 = vmatpush1.msra.mxu0 %v88
    %113 = vmatprep.subr.mxu0 0.0
    %114 = vmatpush1.msra.mxu0 %v87
    %115 = vmatprep.subr.mxu0 0.0
    %116 = vmatpush1.msra.mxu0 %v86
    %117 = vmatprep.subr.mxu0 0.0
    %118 = vmatpush1.msra.mxu0 %v85
    %119 = vmatprep.subr.mxu0 0.0
    %120 = vmatpush1.msra.mxu0 %v84
    %121 = vmatprep.subr.mxu0 0.0
    %122 = vmatpush1.msra.mxu0 %v83
    %123 = vmatprep.subr.mxu0 0.0
    %124 = vmatpush1.msra.mxu0 %v82
    %125 = vmatprep.subr.mxu0 0.0
    %126 = vmatpush1.msra.mxu0 %v81
    %127 = vmatprep.subr.mxu0 0.0
    %128 = vmatpush1.msra.mxu0 %v80
    %129 = vmatprep.subr.mxu0 0.0
    %130 = vmatpush1.msra.mxu0 %v79
    %131 = vmatprep.subr.mxu0 0.0
    %132 = vmatpush1.msra.mxu0 %v78
    %133 = vmatprep.subr.mxu0 0.0
    %134 = vmatpush2.msra.mxu0 0.0
    %135 = vmatprep.subr.mxu0 0.0
    %136 = vmatpush2.msra.mxu0 0.0
    %137 = vmatprep.subr.mxu0 0.0
    %138 = vmatpush2.msra.mxu0 0.0
    %139 = vmatprep.subr.mxu0 0.0
    %140 = vmatpush2.msra.mxu0 0.0
    %141 = vmatprep.subr.mxu0 0.0
    %142 = vmatpush2.msra.mxu0 0.0
    %143 = vmatprep.subr.mxu0 0.0
    %144 = vmatpush2.msra.mxu0 0.0
    %145 = vmatprep.subr.mxu0 0.0
    %146 = vmatpush2.msra.mxu0 0.0
    %147 = vmatprep.subr.mxu0 0.0
    %148 = vmatpush2.msra.mxu0 0.0
    %149 = vmatprep.subr.mxu0 0.0
    %150 = vmatpush2.msra.mxu0 0.0
    %151 = vmatprep.subr.mxu0 0.0
    %152 = vmatpush2.msra.mxu0 0.0
    %153 = vmatprep.subr.mxu0 0.0
    %154 = vmatpush2.msra.mxu0 0.0
    %155 = vmatprep.subr.mxu0 0.0
    %156 = vmatpush2.msra.mxu0 0.0
    %157 = vmatprep.subr.mxu0 0.0
    %158 = vmatpush2.msra.mxu0 0.0
    %159 = vmatprep.subr.mxu0 0.0
    %160 = vmatpush2.msra.mxu0 0.0
    %161 = vmatprep.subr.mxu0 0.0
    %162 = vmatpush2.msra.mxu0 0.0
    %163 = vmatprep.subr.mxu0 0.0
    %164 = vmatpush2.msra.mxu0 0.0
    %165 = vmatprep.mubr.f32.mxu0 0.0
    %166 = vmatmul.mubr.f32.gmra.mxu0 %v68
    %v167 = vpop.f32.mrf.mxu0
    %v168 = vadd.f32 %v99, %v167
    %v169 = vpop.f32.mrf.mxu0
    %170 = vmatprep.mubr.f32.mxu0 0.0
    %171 = vmatmul.mubr.f32.gmra.mxu0 %v69
    %v172 = vpop.f32.mrf.mxu0
    %v173 = vadd.f32 %v99, %v172
    %v174 = vpop.f32.mrf.mxu0
    %175 = vdwg.mxu0
    %v176 = vmax.f32 %v168, 0.0
    %v177 = vmax.f32 %v173, 0.0
    %v178 = vld [vmem:[#allocation2] sm:$0xff]
    %v179 = vld [vmem:[#allocation2 + $0x8] sm:$0xff]
    %v180 = vld [vmem:[#allocation8] sm:$0xff]
    %v181 = vld [vmem:[#allocation8 + $0x8] sm:$0xff]
    %v182 = vld [vmem:[#allocation8 + $0x10] sm:$0xff]
    %v183 = vld [vmem:[#allocation8 + $0x18] sm:$0xff]
    %v184 = vld [vmem:[#allocation8 + $0x20] sm:$0xff]
    %v185 = vld [vmem:[#allocation8 + $0x28] sm:$0xff]
    %v186 = vld [vmem:[#allocation8 + $0x30] sm:$0xff]
    %v187 = vld [vmem:[#allocation8 + $0x38] sm:$0xff]
    %v188 = vld [vmem:[#allocation8 + $0x40] sm:$0xff]
    %v189 = vld [vmem:[#allocation8 + $0x48] sm:$0xff]
    %v190 = vld [vmem:[#allocation8 + $0x50] sm:$0xff]
    %v191 = vld [vmem:[#allocation8 + $0x58] sm:$0xff]
    %v192 = vld [vmem:[#allocation8 + $0x60] sm:$0xff]
    %v193 = vld [vmem:[#allocation8 + $0x68] sm:$0xff]
    %v194 = vld [vmem:[#allocation8 + $0x70] sm:$0xff]
    %v195 = vld [vmem:[#allocation8 + $0x78] sm:$0xff]
    %196 = vmatprep.subr.mxu0 0.0
    %197 = vmatpush1.msra.mxu0 %v195
    %198 = vmatprep.subr.mxu0 0.0
    %199 = vmatpush1.msra.mxu0 %v194
    %200 = vmatprep.subr.mxu0 0.0
    %201 = vmatpush1.msra.mxu0 %v193
    %202 = vmatprep.subr.mxu0 0.0
    %203 = vmatpush1.msra.mxu0 %v192
    %204 = vmatprep.subr.mxu0 0.0
    %205 = vmatpush1.msra.mxu0 %v191
    %206 = vmatprep.subr.mxu0 0.0
    %207 = vmatpush1.msra.mxu0 %v190
    %208 = vmatprep.subr.mxu0 0.0
    %209 = vmatpush1.msra.mxu0 %v189
    %210 = vmatprep.subr.mxu0 0.0
    %211 = vmatpush1.msra.mxu0 %v188
    %212 = vmatprep.subr.mxu0 0.0
    %213 = vmatpush1.msra.mxu0 %v187
    %214 = vmatprep.subr.mxu0 0.0
    %215 = vmatpush1.msra.mxu0 %v186
    %216 = vmatprep.subr.mxu0 0.0
    %217 = vmatpush1.msra.mxu0 %v185
    %218 = vmatprep.subr.mxu0 0.0
    %219 = vmatpush1.msra.mxu0 %v184
    %220 = vmatprep.subr.mxu0 0.0
    %221 = vmatpush1.msra.mxu0 %v183
    %222 = vmatprep.subr.mxu0 0.0
    %223 = vmatpush1.msra.mxu0 %v182
    %224 = vmatprep.subr.mxu0 0.0
    %225 = vmatpush1.msra.mxu0 %v181
    %226 = vmatprep.subr.mxu0 0.0
    %227 = vmatpush1.msra.mxu0 %v180
    %228 = vmatprep.subr.mxu0 0.0
    %229 = vmatpush2.msra.mxu0 0.0
    %230 = vmatprep.subr.mxu0 0.0
    %231 = vmatpush2.msra.mxu0 0.0
    %232 = vmatprep.subr.mxu0 0.0
    %233 = vmatpush2.msra.mxu0 0.0
    %234 = vmatprep.subr.mxu0 0.0
    %235 = vmatpush2.msra.mxu0 0.0
    %236 = vmatprep.subr.mxu0 0.0
    %237 = vmatpush2.msra.mxu0 0.0
    %238 = vmatprep.subr.mxu0 0.0
    %239 = vmatpush2.msra.mxu0 0.0
    %240 = vmatprep.subr.mxu0 0.0
    %241 = vmatpush2.msra.mxu0 0.0
    %242 = vmatprep.subr.mxu0 0.0
    %243 = vmatpush2.msra.mxu0 0.0
    %244 = vmatprep.subr.mxu0 0.0
    %245 = vmatpush2.msra.mxu0 0.0
    %246 = vmatprep.subr.mxu0 0.0
    %247 = vmatpush2.msra.mxu0 0.0
    %248 = vmatprep.subr.mxu0 0.0
    %249 = vmatpush2.msra.mxu0 0.0
    %250 = vmatprep.subr.mxu0 0.0
    %251 = vmatpush2.msra.mxu0 0.0
    %252 = vmatprep.subr.mxu0 0.0
    %253 = vmatpush2.msra.mxu0 0.0
    %254 = vmatprep.subr.mxu0 0.0
    %255 = vmatpush2.msra.mxu0 0.0
    %256 = vmatprep.subr.mxu0 0.0
    %257 = vmatpush2.msra.mxu0 0.0
    %258 = vmatprep.subr.mxu0 0.0
    %259 = vmatpush2.msra.mxu0 0.0
    %260 = vmatprep.mubr.f32.mxu0 0.0
    %261 = vmatmul.mubr.f32.gmra.mxu0 %v176
    %v262 = vpop.f32.mrf.mxu0
    %v263 = vadd.f32 0.0, %v262
    %v264 = vpop.f32.mrf.mxu0
    %265 = vmatprep.mubr.f32.mxu0 0.0
    %266 = vmatmul.mubr.f32.gmra.mxu0 %v177
    %v267 = vpop.f32.mrf.mxu0
    %v268 = vadd.f32 0.0, %v267
    %v269 = vpop.f32.mrf.mxu0
    %270 = vdwg.mxu0
    %v271 = vadd.f32 %v178, %v263
    %v272 = vadd.f32 %v179, %v268
    %273 = vst [vmem:[#allocation2] sm:$0xff] %v271
    %274 = vst [vmem:[#allocation2 + $0x8] sm:$0xff] %v272
    // Predicated region
    $region46: #{tpu_custom_call.1} parent=1 // pred_check
      %p275 = pneg %p72
    $region47: #{tpu_custom_call.1} parent=1 // pred_check_branch
      %277 = sbr.rel (%p275) target = $region49
    $region48: #{tpu_custom_call.1} parent=1 // pred_region
      %v278 = vld [vmem:[#allocation2] sm:$0xff]
      %v279 = vld [vmem:[#allocation2 + $0x8] sm:$0xff]
      %v280 = vadd.f32 %v68, %v278
      %v281 = vadd.f32 %v69, %v279
      %v282 = vld [vmem:[%s4] sm:$0x1]
      %v284 = vlaneseq
      %v285 = vshrl.u32 %v284, 7
      %v286 = vsub.s32 0, %v285
      %v287 = vrot.slane %v282, %v286
      %v289 = vadd.f32 %v280, %v287
      %v290 = vadd.f32 %v281, %v287
      %v291 = vlaneseq
      %v292 = vand.u32 %v291, 127
      %vm293 = vcmp.lt.s32.totalorder %v292, 32
      %v294 = vsel %vm293, %v289, 0.0
      %v295 = vsel %vm293, %v290, 0.0
      %296 = vadd.xlane.f32.xlu0 %v294
      %v297 = vpop.xlane.xlu0 %296
      %298 = vadd.xlane.f32.xlu0 %v295
      %v299 = vpop.xlane.xlu0 %298
      %v300 = vrcp.pop 32.0
      %v301 = vmul.f32 %v297, %v300
      %v302 = vmul.f32 %v299, %v300
      %v303 = vsub.f32 %v289, %v301
      %v304 = vsub.f32 %v290, %v302
      %v305 = vsel %vm293, %v303, 0.0
      %v306 = vsel %vm293, %v304, 0.0
      %v307 = vmul.f32 %v305, %v305
      %v308 = vmul.f32 %v306, %v306
      %309 = vadd.xlane.f32.xlu0 %v307
      %v310 = vpop.xlane.xlu0 %309
      %311 = vadd.xlane.f32.xlu0 %v308
      %v312 = vpop.xlane.xlu0 %311
      %v313 = vmul.f32 %v310, %v300
      %v314 = vmul.f32 %v312, %v300
      %v316 = vlaneseq
      %v317 = vshrl.u32 %v316, 7
      %v318 = vsub.s32 0, %v317
      %v319 = vrot.slane %v70, %v318
      %v321 = vmul.f32 %v319, %v303
      %v322 = vmul.f32 %v319, %v304
      %v323 = vadd.f32 %v313, 1e-06
      %v324 = vadd.f32 %v314, 1e-06
      %v325 = vrsqrt.pop %v323
      %v326 = vrsqrt.pop %v324
      %v327 = vmul.f32 %v321, %v325
      %v328 = vmul.f32 %v322, %v326
      %v330 = vlaneseq
      %v331 = vshrl.u32 %v330, 7
      %v332 = vsub.s32 0, %v331
      %v333 = vrot.slane %v71, %v332
      %v335 = vadd.f32 %v327, %v333
      %v336 = vadd.f32 %v328, %v333
      %337 = vst [vmem:[#allocation9] sm:$0xff] %v335
      %338 = vst [vmem:[#allocation9 + $0x8] sm:$0xff] %v336
    $region49: #{tpu_custom_call.1} parent=1 // pred_fallthru
      _
    // Predicated region
    $region50: #{tpu_custom_call.1} parent=1 // pred_check
      _
    $region51: #{tpu_custom_call.1} parent=1 // pred_check_branch
      %340 = sbr.rel (0) target = $region53
    $region52: #{tpu_custom_call.1} parent=1 // pred_region
      %s342 = ssub.s32 256, 256
      %343 = vsyncadd [#allocation5], %s342
      %s344 = sshll.u32 [#allocation9], 4
      %s345 = int_to_ptr.vmem [resolvable:$true] %s344
      %350 = dma.vmem_to_hbm [thread:$0]  %s345, 256, %s7, [#allocation5], 128, 128, 8
    $region53: #{tpu_custom_call.1} parent=1 // pred_fallthru
      _
    // Predicated region
    $region54: #{tpu_custom_call.1} parent=1 // pred_check
      _
    $region55: #{tpu_custom_call.1} parent=1 // pred_check_branch
      %352 = sbr.rel (0) target = $region57
    $region56: #{tpu_custom_call.1} parent=1 // pred_region
      %353 = dma.done [#allocation5], 256
    $region57: #{tpu_custom_call.1} parent=1 // pred_fallthru
      _
    %354 = vsyncpa [#allocation4], 1
    %355 = vsyncpa [#allocation7], 1
    %356 = vsyncpa [#allocation5], 1

</llo_original>
